<compile_context>
chip_gen: v7x
topology: tpu7x:2x2x1
jax: 0.10.0
libtpu: 0.0.40
codegen_flags: <defaults>
</compile_context>

<pallas_src>
import jax
import jax.numpy as jnp
from jax import lax
from jax.experimental import pallas as pl
from jax.experimental.pallas import tpu as pltpu

# Deterministic "config" parameter (the module's only parameter).
POLARMAP_LOSS_WEIGHT = 1.5

_LANES = 128
_SUBLANES = 8
_MAX_TILE_R = 2048          # cap so the in-kernel f32 working set stays bounded


def _pick_block_budget_bytes():
    """Per-input-block VMEM budget, tuned per TPU generation."""
    try:
        kind = jax.devices()[0].device_kind.lower()
    except Exception:
        return 2 << 20
    if "v5 lite" in kind or "v5lite" in kind or "v5e" in kind:
        return 2 << 20          # v5e: 16 MiB scoped-VMEM default -> stay small
    return 4 << 20              # v6e / v7x / others: plenty of headroom


def _make_kernel(C, tile_r, tiles_per_split, full_tiles, total_tiles, hw_valid):
    """Build the per-block kernel with static shape/config baked in."""

    def fold(v):
        # (tile_r, 128) -> (8, 128): whole-vreg adds only (VPU); the full
        # cross-lane collapse is deferred to the wrapper.
        return jnp.sum(v.reshape(tile_r // _SUBLANES, _SUBLANES, _LANES), axis=0)

    def kernel(pred_ref, tgt_ref, out_ref):
        # pred_ref / tgt_ref : (C, tile_r, 128) VMEM tiles (input dtype)
        # out_ref            : (3, 8, 128) f32 resident accumulator:
        #   [0]=sum(|t_reg-p_reg|*mask)  [1]=sum(mask)  [2]=sum(bce)
        s = pl.program_id(1)
        t = pl.program_id(2)
        g = s * tiles_per_split + t            # global spatial-tile index

        @pl.when(t == 0)
        def _():
            out_ref[...] = jnp.zeros_like(out_ref)

        def accumulate(mask_tile_idx):
            # Per-channel streaming: never materialize a full (C, tile_r, 128)
            # f32 copy of either operand.
            x = pred_ref[0].astype(jnp.float32)          # cls logits
            y = tgt_ref[0].astype(jnp.float32)           # cls labels
            diff = jnp.abs(tgt_ref[1].astype(jnp.float32)
                           - pred_ref[1].astype(jnp.float32))
            for c in range(2, C):
                diff = diff + jnp.abs(tgt_ref[c].astype(jnp.float32)
                                      - pred_ref[c].astype(jnp.float32))

            # Numerically-stable BCE with logits:
            #   max(x, 0) - x*y + log(1 + exp(-|x|))
            bce = jnp.maximum(x, 0.0) - x * y + jnp.log1p(jnp.exp(-jnp.abs(x)))
            is_one = (y == 1.0)

            if mask_tile_idx is None:
                valid = is_one.astype(jnp.float32)
                reg2d = diff * valid
            else:
                # Element-level mask for the tail tile: kills both the garbage
                # rows of a partial block read and (if any) the pad-to-128
                # elements.  jnp.where select -> NaN/Inf in masked lanes is fine.
                rows = lax.broadcasted_iota(jnp.int32, (tile_r, _LANES), 0)
                lanes = lax.broadcasted_iota(jnp.int32, (tile_r, _LANES), 1)
                flat = (mask_tile_idx * tile_r + rows) * _LANES + lanes
                inb = flat < hw_valid
                valid = jnp.where(jnp.logical_and(inb, is_one),
                                  1.0, 0.0).astype(jnp.float32)
                reg2d = jnp.where(inb, diff, 0.0) * valid
                bce = jnp.where(inb, bce, 0.0)

            out_ref[0] += fold(reg2d)
            out_ref[1] += fold(valid)
            out_ref[2] += fold(bce)

        if full_tiles == total_tiles:
            # Every tile is fully in-bounds: no mask machinery anywhere.
            accumulate(None)
        elif full_tiles == 0:
            accumulate(g)
        else:
            @pl.when(g < full_tiles)
            def _():
                accumulate(None)

            @pl.when(g >= full_tiles)
            def _():
                accumulate(g)

    return kernel


def polar_map_loss(pred_polar_map, target_polar_map,
                   loss_weight=POLARMAP_LOSS_WEIGHT):
    """pred_polar_map / target_polar_map: [B, C, H, W] (NCHW)."""
    B, C, H, W = pred_polar_map.shape
    assert target_polar_map.shape == (B, C, H, W)
    assert C >= 2, "need a classification channel plus >=1 regression channel"
    HW = H * W
    itemsize = jnp.dtype(pred_polar_map.dtype).itemsize

    # Free, contiguous reshapes (no NCHW transpose pass over HBM).
    pred3 = pred_polar_map.reshape(B, C, HW)
    tgt3 = target_polar_map.reshape(B, C, HW)

    # Only pad when HW is not a multiple of 128 (rare for feature maps); all
    # other tail handling is done with in-kernel masking, not padding.
    hw128 = pl.cdiv(HW, _LANES) * _LANES
    if hw128 != HW:
        # TODO(synk): this pad still costs one copy; only hit when H*W % 128 != 0.
        pred3 = jnp.pad(pred3, ((0, 0), (0, 0), (0, hw128 - HW)))
        tgt3 = jnp.pad(tgt3, ((0, 0), (0, 0), (0, hw128 - HW)))
    R = hw128 // _LANES
    pred4 = pred3.reshape(B, C, R, _LANES)
    tgt4 = tgt3.reshape(B, C, R, _LANES)

    # Row-tile size: as large as the per-generation VMEM budget allows; the
    # cdiv grid + in-kernel masking makes any tile size valid (no divisor search).
    budget = _pick_block_budget_bytes()
    tile_r = max(_SUBLANES,
                 (budget // (C * _LANES * itemsize)) // _SUBLANES * _SUBLANES)
    tile_r = min(tile_r, _MAX_TILE_R)
    tile_r = min(tile_r, pl.cdiv(R, _SUBLANES) * _SUBLANES)
    num_valid_tiles = pl.cdiv(R, tile_r)

    # On 2-TensorCore parts (v7x / megacore), split spatial tiles to add a
    # second parallel axis when the batch alone can't balance the cores.
    nsplit = 2 if (B % 2 == 1 and num_valid_tiles >= 2) else 1
    tiles_per_split = pl.cdiv(num_valid_tiles, nsplit)
    total_tiles = nsplit * tiles_per_split
    full_tiles = HW // (tile_r * _LANES)       # tiles with no padding/garbage

    kernel = _make_kernel(C, tile_r, tiles_per_split, full_tiles, total_tiles, HW)

    def in_index_map(b, s, t):
        g = s * tiles_per_split + t
        # Clamp so the auto-DMA never starts past the last valid block; the
        # extra tiles created by the core-split re-read the last block and are
        # fully masked in-kernel (contribute exactly zero).
        g = jnp.minimum(g, num_valid_tiles - 1)
        return (b, 0, g, 0)

    # Advisory cost hint for XLA's scheduler (bandwidth-bound reduction).
    cost = pl.CostEstimate(
        flops=B * HW * (3 * (C - 1) + 8),
        transcendentals=2 * B * HW,
        bytes_accessed=2 * B * C * HW * itemsize
                       + B * nsplit * 3 * _SUBLANES * _LANES * 4,
    )

    partials = pl.pallas_call(
        kernel,
        out_shape=jax.ShapeDtypeStruct((B, nsplit, 3, _SUBLANES, _LANES),
                                       jnp.float32),
        grid=(B, nsplit, tiles_per_split),
        in_specs=[
            pl.BlockSpec((None, C, tile_r, _LANES), in_index_map),
            pl.BlockSpec((None, C, tile_r, _LANES), in_index_map),
        ],
        out_specs=pl.BlockSpec((None, None, 3, _SUBLANES, _LANES),
                               lambda b, s, t: (b, s, 0, 0, 0)),
        compiler_params=pltpu.CompilerParams(
            dimension_semantics=("parallel", "parallel", "arbitrary"),
            vmem_limit_bytes=32 * 1024 * 1024),
        cost_estimate=cost,
    )(pred4, tgt4)

    # Final cross-lane collapse + scalar math (tiny) in plain JAX.
    totals = jnp.sum(partials, axis=(0, 1, 3, 4), dtype=jnp.float32)   # (3,)
    reg_sum, valid_sum, bce_sum = totals[0], totals[1], totals[2]

    lw = jnp.float32(loss_weight)
    polar_map_reg_loss = reg_sum / (valid_sum + jnp.float32(0.0001)) * lw
    polar_map_cls_loss = bce_sum / jnp.float32(B * HW) * lw
    loss = polar_map_reg_loss + polar_map_cls_loss

    loss_msg = {
        "polarmap_reg_loss": polar_map_reg_loss,
        "polarmap_cls_loss": polar_map_cls_loss,
    }
    return loss, loss_msg


def _reference(pred, tgt, loss_weight=POLARMAP_LOSS_WEIGHT):
    """Pure-JAX reference mirroring the PyTorch forward exactly."""
    pred = pred.astype(jnp.float32)
    tgt = tgt.astype(jnp.float32)
    p_cls, p_reg = pred[:, 0, ...], pred[:, 1:, ...]
    t_cls, t_reg = tgt[:, 0, ...], tgt[:, 1:, ...]
    mask = (t_cls == 1.0)[:, None, ...].astype(jnp.float32)
    reg = jnp.sum(jnp.abs(t_reg - p_reg) * mask) / (jnp.sum(mask) + 0.0001) * loss_weight
    x, y = p_cls, t_cls
    bce = jnp.maximum(x, 0.0) - x * y + jnp.log1p(jnp.exp(-jnp.abs(x)))
    cls = jnp.mean(bce) * loss_weight
    return reg + cls, reg, cls


if __name__ == "__main__":
    B, C, H, W = 2, 4, 16, 16
    key = jax.random.PRNGKey(0)
    k_pred, k_cls, k_reg = jax.random.split(key, 3)

    pred = jax.random.normal(k_pred, (B, C, H, W), dtype=jnp.float32)

    # Target: channel 0 is a binary {0,1} classification map, channels 1: are
    # continuous regression targets.
    tgt_cls = jax.random.bernoulli(k_cls, p=0.3, shape=(B, 1, H, W)).astype(jnp.float32)
    tgt_reg = jax.random.normal(k_reg, (B, C - 1, H, W), dtype=jnp.float32)
    target = jnp.concatenate([tgt_cls, tgt_reg], axis=1)

    loss, loss_msg = polar_map_loss(pred, target)
    loss = jax.block_until_ready(loss)

    ref_loss, ref_reg, ref_cls = _reference(pred, target)
    assert jnp.allclose(loss, ref_loss, rtol=1e-5, atol=1e-5)
    assert jnp.allclose(loss_msg["polarmap_reg_loss"], ref_reg, rtol=1e-5, atol=1e-5)
    assert jnp.allclose(loss_msg["polarmap_cls_loss"], ref_cls, rtol=1e-5, atol=1e-5)

    print("KERNEL_OK")
</pallas_src>

<mosaic_0001>
module attributes {stable_mosaic.version = 11 : i64} {
  func.func @kernel(%arg0: i32, %arg1: i32, %arg2: i32, %arg3: memref<1x4x8x128xf32, #tpu.memory_space<vmem>>, %arg4: memref<1x4x8x128xf32, #tpu.memory_space<vmem>>, %arg5: memref<1x1x3x8x128xf32, #tpu.memory_space<vmem>>) attributes {dimension_semantics = [#tpu.dimension_semantics<parallel>, #tpu.dimension_semantics<parallel>, #tpu.dimension_semantics<arbitrary>], iteration_bounds = array<i64: 2, 1, 1>, scalar_prefetch = 0 : i64, scratch_operands = 0 : i64, tpu.core_type = #tpu.core_type<tc>, window_params = [{transform_indices = @transform_0, window_bounds = array<i64: 1, 4, 8, 128>}, {transform_indices = @transform_1, window_bounds = array<i64: 1, 4, 8, 128>}, {transform_indices = @transform_2, window_bounds = array<i64: 1, 1, 3, 8, 128>}]} {
    %c1_i32 = arith.constant 1 : i32
    %0 = arith.muli %arg1, %c1_i32 : i32
    %1 = arith.addi %0, %arg2 : i32
    %c0_i32 = arith.constant 0 : i32
    %2 = arith.cmpi eq, %arg2, %c0_i32 : i32
    %3 = arith.extui %2 : i1 to i32
    %c0_i32_0 = arith.constant 0 : i32
    %4 = arith.cmpi ne, %3, %c0_i32_0 : i32
    scf.if %4 {
      %cst_68 = arith.constant 0.000000e+00 : f32
      %84 = vector.broadcast %cst_68 : f32 to vector<3x8x128xf32>
      %c0_69 = arith.constant 0 : index
      %c0_70 = arith.constant 0 : index
      %c0_71 = arith.constant 0 : index
      %c0_72 = arith.constant 0 : index
      %c0_73 = arith.constant 0 : index
      %85 = vector.load %arg5[%c0_69, %c0_70, %c0_71, %c0_72, %c0_73] : memref<1x1x3x8x128xf32, #tpu.memory_space<vmem>>, vector<1x1x3x8x128xf32>
      %86 = vector.shape_cast %85 : vector<1x1x3x8x128xf32> to vector<3x8x128xf32>
      %87 = vector.shape_cast %84 : vector<3x8x128xf32> to vector<1x1x3x8x128xf32>
      tpu.vector_store %arg5[%c0_69, %c0_70, %c0_71, %c0_72, %c0_73], %87 {strides = array<i32>} : memref<1x1x3x8x128xf32, #tpu.memory_space<vmem>>, vector<1x1x3x8x128xf32>,
    } else {
    }
    %c0 = arith.constant 0 : index
    %c0_1 = arith.constant 0 : index
    %c0_2 = arith.constant 0 : index
    %c0_3 = arith.constant 0 : index
    %5 = vector.load %arg3[%c0, %c0_1, %c0_2, %c0_3] : memref<1x4x8x128xf32, #tpu.memory_space<vmem>>, vector<1x1x8x128xf32>
    %6 = vector.shape_cast %5 : vector<1x1x8x128xf32> to vector<8x128xf32>
    %c0_4 = arith.constant 0 : index
    %c0_5 = arith.constant 0 : index
    %c0_6 = arith.constant 0 : index
    %c0_7 = arith.constant 0 : index
    %7 = vector.load %arg4[%c0_4, %c0_5, %c0_6, %c0_7] : memref<1x4x8x128xf32, #tpu.memory_space<vmem>>, vector<1x1x8x128xf32>
    %8 = vector.shape_cast %7 : vector<1x1x8x128xf32> to vector<8x128xf32>
    %c0_8 = arith.constant 0 : index
    %c1 = arith.constant 1 : index
    %c0_9 = arith.constant 0 : index
    %c0_10 = arith.constant 0 : index
    %9 = vector.load %arg4[%c0_8, %c1, %c0_9, %c0_10] : memref<1x4x8x128xf32, #tpu.memory_space<vmem>>, vector<1x1x8x128xf32>
    %10 = vector.shape_cast %9 : vector<1x1x8x128xf32> to vector<8x128xf32>
    %c0_11 = arith.constant 0 : index
    %c1_12 = arith.constant 1 : index
    %c0_13 = arith.constant 0 : index
    %c0_14 = arith.constant 0 : index
    %11 = vector.load %arg3[%c0_11, %c1_12, %c0_13, %c0_14] : memref<1x4x8x128xf32, #tpu.memory_space<vmem>>, vector<1x1x8x128xf32>
    %12 = vector.shape_cast %11 : vector<1x1x8x128xf32> to vector<8x128xf32>
    %13 = arith.subf %10, %12 : vector<8x128xf32>
    %14 = math.absf %13 : vector<8x128xf32>
    %c0_15 = arith.constant 0 : index
    %c2 = arith.constant 2 : index
    %c0_16 = arith.constant 0 : index
    %c0_17 = arith.constant 0 : index
    %15 = vector.load %arg4[%c0_15, %c2, %c0_16, %c0_17] : memref<1x4x8x128xf32, #tpu.memory_space<vmem>>, vector<1x1x8x128xf32>
    %16 = vector.shape_cast %15 : vector<1x1x8x128xf32> to vector<8x128xf32>
    %c0_18 = arith.constant 0 : index
    %c2_19 = arith.constant 2 : index
    %c0_20 = arith.constant 0 : index
    %c0_21 = arith.constant 0 : index
    %17 = vector.load %arg3[%c0_18, %c2_19, %c0_20, %c0_21] : memref<1x4x8x128xf32, #tpu.memory_space<vmem>>, vector<1x1x8x128xf32>
    %18 = vector.shape_cast %17 : vector<1x1x8x128xf32> to vector<8x128xf32>
    %19 = arith.subf %16, %18 : vector<8x128xf32>
    %20 = math.absf %19 : vector<8x128xf32>
    %21 = arith.addf %14, %20 : vector<8x128xf32>
    %c0_22 = arith.constant 0 : index
    %c3 = arith.constant 3 : index
    %c0_23 = arith.constant 0 : index
    %c0_24 = arith.constant 0 : index
    %22 = vector.load %arg4[%c0_22, %c3, %c0_23, %c0_24] : memref<1x4x8x128xf32, #tpu.memory_space<vmem>>, vector<1x1x8x128xf32>
    %23 = vector.shape_cast %22 : vector<1x1x8x128xf32> to vector<8x128xf32>
    %c0_25 = arith.constant 0 : index
    %c3_26 = arith.constant 3 : index
    %c0_27 = arith.constant 0 : index
    %c0_28 = arith.constant 0 : index
    %24 = vector.load %arg3[%c0_25, %c3_26, %c0_27, %c0_28] : memref<1x4x8x128xf32, #tpu.memory_space<vmem>>, vector<1x1x8x128xf32>
    %25 = vector.shape_cast %24 : vector<1x1x8x128xf32> to vector<8x128xf32>
    %26 = arith.subf %23, %25 : vector<8x128xf32>
    %27 = math.absf %26 : vector<8x128xf32>
    %28 = arith.addf %21, %27 : vector<8x128xf32>
    %cst = arith.constant 0.000000e+00 : f32
    %29 = vector.broadcast %cst : f32 to vector<8x128xf32>
    %30 = arith.maximumf %6, %29 : vector<8x128xf32>
    %31 = arith.mulf %6, %8 : vector<8x128xf32>
    %32 = arith.subf %30, %31 : vector<8x128xf32>
    %33 = math.absf %6 : vector<8x128xf32>
    %cst_29 = arith.constant 0.000000e+00 : f32
    %34 = vector.broadcast %cst_29 : f32 to vector<8x128xf32>
    %35 = arith.subf %34, %33 : vector<8x128xf32>
    %36 = math.exp %35 : vector<8x128xf32>
    %37 = math.log1p %36 : vector<8x128xf32>
    %38 = arith.addf %32, %37 : vector<8x128xf32>
    %cst_30 = arith.constant 1.000000e+00 : f32
    %39 = vector.broadcast %cst_30 : f32 to vector<8x128xf32>
    %40 = arith.cmpf oeq, %8, %39 : vector<8x128xf32>
    %41 = tpu.iota {dimensions = array<i32: 0>} : vector<8x128xi32>
    %42 = tpu.iota {dimensions = array<i32: 1>} : vector<8x128xi32>
    %c8_i32 = arith.constant 8 : i32
    %43 = arith.muli %1, %c8_i32 : i32
    %44 = vector.broadcast %43 : i32 to vector<8x128xi32>
    %45 = arith.addi %44, %41 : vector<8x128xi32>
    %c128_i32 = arith.constant 128 : i32
    %46 = vector.broadcast %c128_i32 : i32 to vector<8x128xi32>
    %47 = arith.muli %45, %46 : vector<8x128xi32>
    %48 = arith.addi %47, %42 : vector<8x128xi32>
    %c256_i32 = arith.constant 256 : i32
    %49 = vector.broadcast %c256_i32 : i32 to vector<8x128xi32>
    %50 = arith.cmpi slt, %48, %49 : vector<8x128xi32>
    %51 = arith.andi %50, %40 : vector<8x128xi1>
    %cst_31 = arith.constant 1.000000e+00 : f32
    %cst_32 = arith.constant 0.000000e+00 : f32
    %52 = vector.broadcast %cst_31 : f32 to vector<8x128xf32>
    %53 = vector.broadcast %cst_32 : f32 to vector<8x128xf32>
    %54 = arith.select %51, %52, %53 : vector<8x128xi1>, vector<8x128xf32>
    %cst_33 = arith.constant 0.000000e+00 : f32
    %55 = vector.broadcast %cst_33 : f32 to vector<8x128xf32>
    %56 = arith.select %50, %28, %55 : vector<8x128xi1>, vector<8x128xf32>
    %57 = arith.mulf %56, %54 : vector<8x128xf32>
    %cst_34 = arith.constant 0.000000e+00 : f32
    %58 = vector.broadcast %cst_34 : f32 to vector<8x128xf32>
    %59 = arith.select %50, %38, %58 : vector<8x128xi1>, vector<8x128xf32>
    %c0_35 = arith.constant 0 : index
    %c0_36 = arith.constant 0 : index
    %c0_37 = arith.constant 0 : index
    %c0_38 = arith.constant 0 : index
    %c0_39 = arith.constant 0 : index
    %60 = vector.load %arg5[%c0_35, %c0_36, %c0_37, %c0_38, %c0_39] : memref<1x1x3x8x128xf32, #tpu.memory_space<vmem>>, vector<1x1x1x8x128xf32>
    %61 = vector.shape_cast %60 : vector<1x1x1x8x128xf32> to vector<8x128xf32>
    %62 = vector.shape_cast %57 : vector<8x128xf32> to vector<1x8x128xf32>
    %cst_40 = arith.constant dense<0.000000e+00> : vector<8x128xf32>
    %63 = vector.multi_reduction <add>, %62, %cst_40 [0] : vector<1x8x128xf32> to vector<8x128xf32>
    %64 = arith.addf %61, %63 : vector<8x128xf32>
    %c0_41 = arith.constant 0 : index
    %c0_42 = arith.constant 0 : index
    %c0_43 = arith.constant 0 : index
    %c0_44 = arith.constant 0 : index
    %c0_45 = arith.constant 0 : index
    %65 = vector.load %arg5[%c0_41, %c0_42, %c0_43, %c0_44, %c0_45] : memref<1x1x3x8x128xf32, #tpu.memory_space<vmem>>, vector<1x1x1x8x128xf32>
    %66 = vector.shape_cast %65 : vector<1x1x1x8x128xf32> to vector<8x128xf32>
    %67 = vector.shape_cast %64 : vector<8x128xf32> to vector<1x1x1x8x128xf32>
    tpu.vector_store %arg5[%c0_41, %c0_42, %c0_43, %c0_44, %c0_45], %67 {strides = array<i32>} : memref<1x1x3x8x128xf32, #tpu.memory_space<vmem>>, vector<1x1x1x8x128xf32>,
    %c0_46 = arith.constant 0 : index
    %c0_47 = arith.constant 0 : index
    %c1_48 = arith.constant 1 : index
    %c0_49 = arith.constant 0 : index
    %c0_50 = arith.constant 0 : index
    %68 = vector.load %arg5[%c0_46, %c0_47, %c1_48, %c0_49, %c0_50] : memref<1x1x3x8x128xf32, #tpu.memory_space<vmem>>, vector<1x1x1x8x128xf32>
    %69 = vector.shape_cast %68 : vector<1x1x1x8x128xf32> to vector<8x128xf32>
    %70 = vector.shape_cast %54 : vector<8x128xf32> to vector<1x8x128xf32>
    %cst_51 = arith.constant dense<0.000000e+00> : vector<8x128xf32>
    %71 = vector.multi_reduction <add>, %70, %cst_51 [0] : vector<1x8x128xf32> to vector<8x128xf32>
    %72 = arith.addf %69, %71 : vector<8x128xf32>
    %c0_52 = arith.constant 0 : index
    %c0_53 = arith.constant 0 : index
    %c1_54 = arith.constant 1 : index
    %c0_55 = arith.constant 0 : index
    %c0_56 = arith.constant 0 : index
    %73 = vector.load %arg5[%c0_52, %c0_53, %c1_54, %c0_55, %c0_56] : memref<1x1x3x8x128xf32, #tpu.memory_space<vmem>>, vector<1x1x1x8x128xf32>
    %74 = vector.shape_cast %73 : vector<1x1x1x8x128xf32> to vector<8x128xf32>
    %75 = vector.shape_cast %72 : vector<8x128xf32> to vector<1x1x1x8x128xf32>
    tpu.vector_store %arg5[%c0_52, %c0_53, %c1_54, %c0_55, %c0_56], %75 {strides = array<i32>} : memref<1x1x3x8x128xf32, #tpu.memory_space<vmem>>, vector<1x1x1x8x128xf32>,
    %c0_57 = arith.constant 0 : index
    %c0_58 = arith.constant 0 : index
    %c2_59 = arith.constant 2 : index
    %c0_60 = arith.constant 0 : index
    %c0_61 = arith.constant 0 : index
    %76 = vector.load %arg5[%c0_57, %c0_58, %c2_59, %c0_60, %c0_61] : memref<1x1x3x8x128xf32, #tpu.memory_space<vmem>>, vector<1x1x1x8x128xf32>
    %77 = vector.shape_cast %76 : vector<1x1x1x8x128xf32> to vector<8x128xf32>
    %78 = vector.shape_cast %59 : vector<8x128xf32> to vector<1x8x128xf32>
    %cst_62 = arith.constant dense<0.000000e+00> : vector<8x128xf32>
    %79 = vector.multi_reduction <add>, %78, %cst_62 [0] : vector<1x8x128xf32> to vector<8x128xf32>
    %80 = arith.addf %77, %79 : vector<8x128xf32>
    %c0_63 = arith.constant 0 : index
    %c0_64 = arith.constant 0 : index
    %c2_65 = arith.constant 2 : index
    %c0_66 = arith.constant 0 : index
    %c0_67 = arith.constant 0 : index
    %81 = vector.load %arg5[%c0_63, %c0_64, %c2_65, %c0_66, %c0_67] : memref<1x1x3x8x128xf32, #tpu.memory_space<vmem>>, vector<1x1x1x8x128xf32>
    %82 = vector.shape_cast %81 : vector<1x1x1x8x128xf32> to vector<8x128xf32>
    %83 = vector.shape_cast %80 : vector<8x128xf32> to vector<1x1x1x8x128xf32>
    tpu.vector_store %arg5[%c0_63, %c0_64, %c2_65, %c0_66, %c0_67], %83 {strides = array<i32>} : memref<1x1x3x8x128xf32, #tpu.memory_space<vmem>>, vector<1x1x1x8x128xf32>,
    return
  }
  func.func @transform_0(%arg0: i32, %arg1: i32, %arg2: i32) -> (i32, i32, i32, i32) {
    %c1_i32 = arith.constant 1 : i32
    %0 = arith.muli %arg1, %c1_i32 : i32
    %1 = arith.addi %0, %arg2 : i32
    %c0_i32 = arith.constant 0 : i32
    %2 = arith.minsi %1, %c0_i32 : i32
    %c0_i32_0 = arith.constant 0 : i32
    %c0_i32_1 = arith.constant 0 : i32
    %c0_i32_2 = arith.constant 0 : i32
    return %arg0, %c0_i32_0, %2, %c0_i32_1 : i32, i32, i32, i32
  }
  func.func @transform_1(%arg0: i32, %arg1: i32, %arg2: i32) -> (i32, i32, i32, i32) {
    %c1_i32 = arith.constant 1 : i32
    %0 = arith.muli %arg1, %c1_i32 : i32
    %1 = arith.addi %0, %arg2 : i32
    %c0_i32 = arith.constant 0 : i32
    %2 = arith.minsi %1, %c0_i32 : i32
    %c0_i32_0 = arith.constant 0 : i32
    %c0_i32_1 = arith.constant 0 : i32
    %c0_i32_2 = arith.constant 0 : i32
    return %arg0, %c0_i32_0, %2, %c0_i32_1 : i32, i32, i32, i32
  }
  func.func @transform_2(%arg0: i32, %arg1: i32, %arg2: i32) -> (i32, i32, i32, i32, i32) {
    %c0_i32 = arith.constant 0 : i32
    %c0_i32_0 = arith.constant 0 : i32
    %c0_i32_1 = arith.constant 0 : i32
    %c0_i32_2 = arith.constant 0 : i32
    return %arg0, %arg1, %c0_i32, %c0_i32_0, %c0_i32_1 : i32, i32, i32, i32, i32
  }
}

</mosaic_0001>

<llo_original>
// kernel: tpu_custom_call.1
$region0: #{tpu_custom_call.1}
  #allocation0 [shape = 'u32[]', space=smem, size = 0x4, offset = 0x4, fixed_abs, tag = 'smem constant byte address 0x4 - core index']
  #allocation1 [shape = 'u32[144,128]{1,0:T(1,128)}', space=vmem, size = 0x12000, scoped, tag = 'internal scratch']
  #allocation8 [shape = 's32[]', space=sflag, size = 0x4, offset = 0, fixed_abs, tag = 'sflag constant byte address 0x0 - dummy sync flag']
  #allocation10 [shape = 's32[]', space=sflag, size = 0x4, offset = 0, fixed_abs, tag = 'sflag constant byte address 0x0 - dummy sync flag']
  %s0 = inlined_call_operand.hbm [shape: f32[2,4,2,128], index: 0, kind: input, shape index: {}]
  %s1 = inlined_call_operand.hbm [shape: f32[2,4,2,128], index: 1, kind: input, shape index: {}]
  %s2 = inlined_call_operand.hbm [shape: f32[2,1,3,8,128], index: 2, kind: output, shape index: {}]
  %s3 = sld [smem:[#allocation0]]
  $region53: #{tpu_custom_call.1} parent=0
    _
  %s5 = ssub.s32 1, %s3
  %s6 = scalar_select 0, %s5, %s3
  $region1: #{tpu_custom_call.1} parent=0
    #allocation2 [shape = 'u8[32768]{0}', space=vmem, size = 0x8000, scoped, tag = 'input window, operand 0']
    #allocation3 [shape = 's32[2]{0}', space=sflag, size = 0x8, scoped, tag = 'scoped memory for tpu_custom_call.1']
    #allocation4 [shape = 's32[2]{0}', space=sflag, size = 0x8, scoped, tag = 'scoped memory for tpu_custom_call.1']
    #allocation5 [shape = 'u8[32768]{0}', space=vmem, size = 0x8000, scoped, tag = 'input window, operand 1']
    #allocation6 [shape = 's32[2]{0}', space=sflag, size = 0x8, scoped, tag = 'scoped memory for tpu_custom_call.1']
    #allocation7 [shape = 'u8[24576]{0}', space=vmem, size = 0x6000, scoped, tag = 'output window, operand 0']
    %7 = vsyncpa [#allocation3], 0
    %s8 = scalar_lea.sflag [#allocation3], 1
    %9 = vsyncpa %s8, 0
    %10 = vsyncpa [#allocation6], 0
    %s11 = scalar_lea.sflag [#allocation6], 1
    %12 = vsyncpa %s11, 0
    %13 = vsyncpa [#allocation4], 0
    %s14 = scalar_lea.sflag [#allocation4], 1
    %15 = vsyncpa %s14, 0
    loop: start=0, step=1, limit=4
    $region2: #{tpu_custom_call.1} parent=1 // loop_pre_header
      _
    $region3: #{tpu_custom_call.1} parent=1 // loop_header
      %s17 = sphi 0, %s21
      %p18 = scmp.ge.s32.totalorder %s17, 4
      %s24 = sphi 0, %s43
      %s25 = sphi 0, %s39
      %s26 = sphi 0, %s35
      %s27 = sphi 0, %s24
      %s28 = sphi 0, %s25
      %s29 = sphi 0, %s26
      %s30 = sphi 0, %s27
      %s31 = sphi 0, %s28
      %s32 = sphi 0, %s29
      %s54 = sphi 0, %s56
      %s57 = sphi 0, %s54
      %s58 = sphi 0, %s57
      %s74 = sphi 0, %s58
      %s88 = sphi 0, %s90
      %s91 = sphi 0, %s88
      %s92 = sphi 0, %s91
      %s108 = sphi 0, %s92
      %s116 = sphi 0, %s118
      %s119 = sphi 0, %s116
      %s120 = sphi 0, %s119
      %s136 = sphi 0, %s120
    $region4: #{tpu_custom_call.1} parent=1 // loop_header_branch
      %20 = sbr.rel (%p18) target = $region8
    $region5: #{tpu_custom_call.1} parent=1 // loop_body
      %s22 = ssub.s32 %s17, 1
      %s23 = ssub.s32 %s17, 2
      %s33 = sadd.s32 1, %s26
      %p34 = scmp.ge.s32.totalorder %s33, 1
      %s35 = scalar_select %p34, 0, %s33
      %s36 = sadd.s32 1, %s25
      %s37 = scalar_select %p34, %s36, %s25
      %p38 = scmp.ge.s32.totalorder %s37, 1
      %s39 = scalar_select %p38, 0, %s37
      %s40 = sadd.s32 1, %s24
      %s41 = scalar_select %p38, %s40, %s24
      %p42 = scmp.ge.s32.totalorder %s41, 2
      %s43 = scalar_select %p42, 0, %s41
      %s44 = sadd.s32 %s25, %s26
      %p45 = scmp.lt.s32.totalorder %s44, 0
      %s46 = scalar_select %p45, %s44, 0
      %s47 = sadd.s32 %s39, %s35
      %p48 = scmp.lt.s32.totalorder %s47, 0
      %s49 = scalar_select %p48, %s47, 0
      %s50 = ssub.s32 %s24, %s43
      %s51 = ssub.s32 %s46, %s49
      %s52 = sor.u32 %s50, %s51
      %p53 = scmp.eq.s32.totalorder %s52, 0
      %s55 = sadd.s32 %s54, 1
      %s56 = scalar_select %p53, %s54, %s55
      %p59 = pneg %p53
      %p60 = scmp.eq.s32.totalorder %s17, 1
      %p61 = por %p59, %p60
      %p62 = scmp.ne.s32.totalorder %s54, %s57
      %p63 = scmp.eq.s32.totalorder %s17, 0
      %p64 = por %p62, %p63
      %p65 = scmp.ne.s32.totalorder %s54, %s57
      %p66 = scmp.eq.s32.totalorder %s22, 1
      %p67 = por %p65, %p66
      %p68 = scmp.ne.s32.totalorder %s57, %s58
      %p69 = scmp.eq.s32.totalorder %s22, 0
      %p70 = por %p68, %p69
      %p71 = scmp.ne.s32.totalorder %s57, %s58
      %p72 = scmp.eq.s32.totalorder %s23, 1
      %p73 = por %p71, %p72
      %p75 = scmp.ne.s32.totalorder %s58, %s74
      %p76 = scmp.eq.s32.totalorder %s23, 0
      %p77 = por %p75, %p76
      %s78 = sadd.s32 %s25, %s26
      %p79 = scmp.lt.s32.totalorder %s78, 0
      %s80 = scalar_select %p79, %s78, 0
      %s81 = sadd.s32 %s39, %s35
      %p82 = scmp.lt.s32.totalorder %s81, 0
      %s83 = scalar_select %p82, %s81, 0
      %s84 = ssub.s32 %s24, %s43
      %s85 = ssub.s32 %s80, %s83
      %s86 = sor.u32 %s84, %s85
      %p87 = scmp.eq.s32.totalorder %s86, 0
      %s89 = sadd.s32 %s88, 1
      %s90 = scalar_select %p87, %s88, %s89
      %p93 = pneg %p87
      %p94 = scmp.eq.s32.totalorder %s17, 1
      %p95 = por %p93, %p94
      %p96 = scmp.ne.s32.totalorder %s88, %s91
      %p97 = scmp.eq.s32.totalorder %s17, 0
      %p98 = por %p96, %p97
      %p99 = scmp.ne.s32.totalorder %s88, %s91
      %p100 = scmp.eq.s32.totalorder %s22, 1
      %p101 = por %p99, %p100
      %p102 = scmp.ne.s32.totalorder %s91, %s92
      %p103 = scmp.eq.s32.totalorder %s22, 0
      %p104 = por %p102, %p103
      %p105 = scmp.ne.s32.totalorder %s91, %s92
      %p106 = scmp.eq.s32.totalorder %s23, 1
      %p107 = por %p105, %p106
      %p109 = scmp.ne.s32.totalorder %s92, %s108
      %p110 = scmp.eq.s32.totalorder %s23, 0
      %p111 = por %p109, %p110
      %s112 = ssub.s32 %s24, %s43
      %s113 = ssub.s32 %s25, %s39
      %s114 = sor.u32 %s112, %s113
      %p115 = scmp.eq.s32.totalorder %s114, 0
      %s117 = sadd.s32 %s116, 1
      %s118 = scalar_select %p115, %s116, %s117
      %p121 = pneg %p115
      %p122 = scmp.eq.s32.totalorder %s17, 1
      %p123 = por %p121, %p122
      %p124 = scmp.ne.s32.totalorder %s116, %s119
      %p125 = scmp.eq.s32.totalorder %s17, 0
      %p126 = por %p124, %p125
      %p127 = scmp.ne.s32.totalorder %s116, %s119
      %p128 = scmp.eq.s32.totalorder %s22, 1
      %p129 = por %p127, %p128
      %p130 = scmp.ne.s32.totalorder %s119, %s120
      %p131 = scmp.eq.s32.totalorder %s22, 0
      %p132 = por %p130, %p131
      %p133 = scmp.ne.s32.totalorder %s119, %s120
      %p134 = scmp.eq.s32.totalorder %s23, 1
      %p135 = por %p133, %p134
      %p137 = scmp.ne.s32.totalorder %s120, %s136
      %p138 = scmp.eq.s32.totalorder %s23, 0
      %p139 = por %p137, %p138
      %p140 = scmp.le.s32.totalorder 1, %s17
      %p141 = scmp.lt.s32.totalorder %s17, 3
      %p142 = pnand %p140, %p141
      %p143 = pneg %p142
      // Predicated region
      $region9: #{tpu_custom_call.1} parent=5 // pred_check
        _
      $region10: #{tpu_custom_call.1} parent=5 // pred_check_branch
        %145 = sbr.rel (%p142) target = $region12
      $region11: #{tpu_custom_call.1} parent=5 // pred_region
        %s146 = ssub.s32 %s17, 1
      $region12: #{tpu_custom_call.1} parent=5 // pred_fallthru
        _
      %p147 = scmp.lt.s32.totalorder %s17, 2
      // Predicated region
      $region13: #{tpu_custom_call.1} parent=5 // pred_check
        %p148 = pneg %p147
      $region14: #{tpu_custom_call.1} parent=5 // pred_check_branch
        %150 = sbr.rel (%p148) target = $region16
      $region15: #{tpu_custom_call.1} parent=5 // pred_region
        // Predicated region
        $region17: #{tpu_custom_call.1} parent=15 // pred_check
          %p151 = pneg %p64
        $region18: #{tpu_custom_call.1} parent=15 // pred_check_branch
          %153 = sbr.rel (%p151) target = $region20
        $region19: #{tpu_custom_call.1} parent=15 // pred_region
          #allocation9 [shape = 'u32[6]{0}', space=smem, size = 0x18, scoped, tag = 'DMA stride descriptor']
          %s154 = sand.u32 %s54, 1
          %s155 = scalar_lea.sflag [#allocation3], %s154
          %s156 = sand.u32 %s54, 1
          %s157 = smul.addr %s156, 32
          %s158 = scalar_lea.vmem [#allocation2], %s157
          %s159 = sadd.s32 %s25, %s26
          %p160 = scmp.lt.s32.totalorder %s159, 0
          %s161 = scalar_select %p160, %s159, 0
          %s162 = smul.u32 4, %s161
          %s163 = ssub.s32 1, %s162
          %s164 = smul.u32 128, %s163
          %s166 = ssub.s32 512, %s164
          %167 = vsyncadd %s155, %s166
          %p168 = scmp.ne.s32.totalorder 0, %s164
          %s169 = smul.addr %s24, 4
          %s170 = sadd.s32 %s162, %s169
          %s171 = smul.addr %s170, 32
          %s172 = scalar_lea.hbm %s0, %s171
          %s173 = smul.u32 2, %s163
          %s174 = smul.u32 %s173, 4
          %s176 = sshll.u32 1, 14
          %s177 = sxor.u32 4294967295, %s176
          %s179 = sld [smem:[#allocation0]]
          %s180 = sadd.s32 2, %s179
          %s182 = sshll.u32 7, 26
          %s183 = sxor.u32 4294967295, %s182
          %s184 = sand.u32 0, %s183
          %s185 = sshll.u32 %s180, 26
          %s186 = sor.u32 %s184, %s185
          %s187 = sshll.u32 %s158, 4
          %s188 = int_to_ptr.vmem [resolvable:$true] %s187
          %s189 = sshll.u32 %s174, 4
          %194 = sst [smem:[#allocation9]] 32
          %s195 = scalar_lea.smem [#allocation9], 1
          %196 = sst [smem:[%s195]] 128
          %s197 = scalar_lea.smem [#allocation9], 2
          %198 = sst [smem:[%s197]] %s163
          %s199 = scalar_lea.smem [#allocation9], 3
          %200 = sst [smem:[%s199]] 32
          %s201 = scalar_lea.smem [#allocation9], 4
          %202 = sst [smem:[%s201]] 32
          %s203 = scalar_lea.smem [#allocation9], 5
          %204 = sst [smem:[%s203]] 2
          %206 = dma.general (%p168), %s172, %s189, %s188, %s155, [#allocation8], [#allocation9], %s186, 0
        $region20: #{tpu_custom_call.1} parent=15 // pred_fallthru
          _
        // Predicated region
        $region21: #{tpu_custom_call.1} parent=15 // pred_check
          %p207 = pneg %p98
        $region22: #{tpu_custom_call.1} parent=15 // pred_check_branch
          %209 = sbr.rel (%p207) target = $region24
        $region23: #{tpu_custom_call.1} parent=15 // pred_region
          #allocation11 [shape = 'u32[6]{0}', space=smem, size = 0x18, scoped, tag = 'DMA stride descriptor']
          %s210 = sand.u32 %s88, 1
          %s211 = scalar_lea.sflag [#allocation6], %s210
          %s212 = sand.u32 %s88, 1
          %s213 = smul.addr %s212, 32
          %s214 = scalar_lea.vmem [#allocation5], %s213
          %s215 = sadd.s32 %s25, %s26
          %p216 = scmp.lt.s32.totalorder %s215, 0
          %s217 = scalar_select %p216, %s215, 0
          %s218 = smul.u32 4, %s217
          %s219 = ssub.s32 1, %s218
          %s220 = smul.u32 128, %s219
          %s222 = ssub.s32 512, %s220
          %223 = vsyncadd %s211, %s222
          %p224 = scmp.ne.s32.totalorder 0, %s220
          %s225 = smul.addr %s24, 4
          %s226 = sadd.s32 %s218, %s225
          %s227 = smul.addr %s226, 32
          %s228 = scalar_lea.hbm %s1, %s227
          %s229 = smul.u32 2, %s219
          %s230 = smul.u32 %s229, 4
          %s232 = sshll.u32 1, 14
          %s233 = sxor.u32 4294967295, %s232
          %s235 = sld [smem:[#allocation0]]
          %s236 = sadd.s32 2, %s235
          %s238 = sshll.u32 7, 26
          %s239 = sxor.u32 4294967295, %s238
          %s240 = sand.u32 0, %s239
          %s241 = sshll.u32 %s236, 26
          %s242 = sor.u32 %s240, %s241
          %s243 = sshll.u32 %s214, 4
          %s244 = int_to_ptr.vmem [resolvable:$true] %s243
          %s245 = sshll.u32 %s230, 4
          %250 = sst [smem:[#allocation11]] 32
          %s251 = scalar_lea.smem [#allocation11], 1
          %252 = sst [smem:[%s251]] 128
          %s253 = scalar_lea.smem [#allocation11], 2
          %254 = sst [smem:[%s253]] %s219
          %s255 = scalar_lea.smem [#allocation11], 3
          %256 = sst [smem:[%s255]] 32
          %s257 = scalar_lea.smem [#allocation11], 4
          %258 = sst [smem:[%s257]] 32
          %s259 = scalar_lea.smem [#allocation11], 5
          %260 = sst [smem:[%s259]] 2
          %262 = dma.general (%p224), %s228, %s245, %s244, %s211, [#allocation10], [#allocation11], %s242, 0
        $region24: #{tpu_custom_call.1} parent=15 // pred_fallthru
          _
      $region16: #{tpu_custom_call.1} parent=5 // pred_fallthru
        _
      %p263 = scmp.le.s32.totalorder 1, %s17
      %p264 = scmp.lt.s32.totalorder %s17, 3
      %p265 = pnand %p263, %p264
      %p266 = pneg %p265
      // Predicated region
      $region25: #{tpu_custom_call.1} parent=5 // pred_check
        _
      $region26: #{tpu_custom_call.1} parent=5 // pred_check_branch
        %268 = sbr.rel (%p265) target = $region28
      $region27: #{tpu_custom_call.1} parent=5 // pred_region
        %s269 = ssub.s32 %s17, 1
        %s270 = sand.u32 %s57, 1
        %s271 = scalar_lea.sflag [#allocation3], %s270
        %s272 = sand.u32 %s57, 1
        %s273 = smul.addr %s272, 32
        %s274 = scalar_lea.vmem [#allocation2], %s273
        // Predicated region
        $region29: #{tpu_custom_call.1} parent=27 // pred_check
          %p275 = pneg %p70
        $region30: #{tpu_custom_call.1} parent=27 // pred_check_branch
          %277 = sbr.rel (%p275) target = $region32
        $region31: #{tpu_custom_call.1} parent=27 // pred_region
          %278 = dma.done %s271, 512
        $region32: #{tpu_custom_call.1} parent=27 // pred_fallthru
          _
        %s279 = sand.u32 %s91, 1
        %s280 = scalar_lea.sflag [#allocation6], %s279
        %s281 = sand.u32 %s91, 1
        %s282 = smul.addr %s281, 32
        %s283 = scalar_lea.vmem [#allocation5], %s282
        // Predicated region
        $region33: #{tpu_custom_call.1} parent=27 // pred_check
          %p284 = pneg %p104
        $region34: #{tpu_custom_call.1} parent=27 // pred_check_branch
          %286 = sbr.rel (%p284) target = $region36
        $region35: #{tpu_custom_call.1} parent=27 // pred_region
          %287 = dma.done %s280, 512
        $region36: #{tpu_custom_call.1} parent=27 // pred_fallthru
          _
        %s288 = sand.u32 %s57, 1
        %s289 = scalar_lea.sflag [#allocation3], %s288
        %s290 = sand.u32 %s57, 1
        %s291 = smul.addr %s290, 32
        %s292 = scalar_lea.vmem [#allocation2], %s291
        %p293 = pneg %p70
        %p294 = pneg %p67
        %s295 = sand.u32 %s91, 1
        %s296 = scalar_lea.sflag [#allocation6], %s295
        %s297 = sand.u32 %s91, 1
        %s298 = smul.addr %s297, 32
        %s299 = scalar_lea.vmem [#allocation5], %s298
        %p300 = pneg %p104
        %p301 = pneg %p101
        %p302 = pneg %p132
        %p303 = pneg %p129
        %s304 = sand.u32 %s119, 1
        %s305 = scalar_lea.sflag [#allocation4], %s304
        %s306 = sand.u32 %s119, 1
        %s307 = smul.addr %s306, 24
        %s308 = scalar_lea.vmem [#allocation7], %s307
        %s309 = sadd.s32 %s28, %s29
        %p310 = scmp.lt.s32.totalorder %s309, 0
        %s311 = scalar_select %p310, %s309, 0
        %s312 = smul.u32 4, %s311
        %s313 = ssub.s32 1, %s312
        %s314 = smul.u32 128, %s313
        %s315 = sadd.s32 %s28, %s29
        %p316 = scmp.lt.s32.totalorder %s315, 0
        %s317 = scalar_select %p316, %s315, 0
        %s318 = smul.u32 4, %s317
        %s319 = ssub.s32 1, %s318
        %s320 = smul.u32 128, %s319
        %s321 = sadd.s32 %s28, %s29
        %p322 = scmp.eq.s32.totalorder %s29, 0
        // Predicated region
        $region37: #{tpu_custom_call.1} parent=27 // pred_check
          %p323 = pneg %p322
        $region38: #{tpu_custom_call.1} parent=27 // pred_check_branch
          %325 = sbr.rel (%p323) target = $region40
        $region39: #{tpu_custom_call.1} parent=27 // pred_region
          %326 = vst [vmem:[%s308] sm:$0xff] 0.0
          %327 = vst [vmem:[%s308 + $0x8] sm:$0xff] 0.0
          %328 = vst [vmem:[%s308 + $0x10] sm:$0xff] 0.0
        $region40: #{tpu_custom_call.1} parent=27 // pred_fallthru
          _
        %v329 = vld [vmem:[%s274] sm:$0xff]
        %v330 = vld [vmem:[%s283] sm:$0xff]
        %s331 = scalar_lea.vmem %s283, 8 [#allocation5]
        %v332 = vld [vmem:[%s331] sm:$0xff]
        %s333 = scalar_lea.vmem %s274, 8 [#allocation2]
        %v334 = vld [vmem:[%s333] sm:$0xff]
        %v335 = vsub.f32 %v332, %v334
        %v336 = vand.u32 2147483647, %v335
        %s337 = scalar_lea.vmem %s283, 16 [#allocation5]
        %v338 = vld [vmem:[%s337] sm:$0xff]
        %s339 = scalar_lea.vmem %s274, 16 [#allocation2]
        %v340 = vld [vmem:[%s339] sm:$0xff]
        %v341 = vsub.f32 %v338, %v340
        %v342 = vand.u32 2147483647, %v341
        %v343 = vadd.f32 %v336, %v342
        %s344 = scalar_lea.vmem %s283, 24 [#allocation5]
        %v345 = vld [vmem:[%s344] sm:$0xff]
        %s346 = scalar_lea.vmem %s274, 24 [#allocation2]
        %v347 = vld [vmem:[%s346] sm:$0xff]
        %v348 = vsub.f32 %v345, %v347
        %v349 = vand.u32 2147483647, %v348
        %v350 = vadd.f32 %v343, %v349
        %v351 = vmax.f32 %v329, 0.0
        %v352 = vmul.f32 %v329, %v330
        %v353 = vsub.f32 %v351, %v352
        %v354 = vand.u32 2147483647, %v329
        %v355 = vsub.f32 0.0, %v354
        %v356 = vmul.f32 %v355, 1.442695
        %v357 = vpow.pop %v356
        %v358 = vadd.f32 %v357, 1.0
        %v359 = vlog2.pop %v358
        %v360 = vmul.f32 %v359, 0.6931472
        %v361 = vmul.f32 -0.5, %v357
        %v362 = vadd.f32 %v361, 1.0
        %v363 = vmul.f32 %v362, %v357
        %v364 = vand.u32 2147483647, %v357
        %vm365 = vcmp.lt.f32.partialorder %v364, 0.0004427343
        %v366 = vsel %vm365, %v363, %v360
        %v367 = vadd.f32 %v353, %v366
        %vm368 = vcmp.eq.f32.partialorder %v330, 1.0
        %v369 = vlaneseq
        %v370 = vshrl.u32 %v369, 7
        %v371 = vlaneseq
        %v372 = vand.u32 %v371, 127
        %s373 = smul.u32 %s321, 8
        %v374 = vstv %s373
        %v375 = vadd.s32 %v374, %v370
        %v376 = vmul.u32 %v375, 128
        %v377 = vadd.s32 %v376, %v372
        %vm378 = vcmp.lt.s32.totalorder %v377, 256
        %vm379 = vmand %vm378, %vm368
        %v380 = vsel %vm379, 1.0, 0.0
        %v381 = vsel %vm378, %v350, 0.0
        %v382 = vmul.f32 %v381, %v380
        %v383 = vsel %vm378, %v367, 0.0
        %v384 = vld [vmem:[%s308] sm:$0xff]
        %v385 = vadd.f32 %v382, 0.0
        %v386 = vadd.f32 %v384, %v385
        %387 = vst [vmem:[%s308] sm:$0xff] %v386
        %s388 = scalar_lea.vmem %s308, 8 [#allocation7]
        %v389 = vld [vmem:[%s388] sm:$0xff]
        %v390 = vadd.f32 %v380, 0.0
        %v391 = vadd.f32 %v389, %v390
        %392 = vst [vmem:[%s388] sm:$0xff] %v391
        %s393 = scalar_lea.vmem %s308, 16 [#allocation7]
        %v394 = vld [vmem:[%s393] sm:$0xff]
        %v395 = vadd.f32 %v383, 0.0
        %v396 = vadd.f32 %v394, %v395
        %397 = vst [vmem:[%s393] sm:$0xff] %v396
        %s398 = sand.u32 %s119, 1
        %s399 = scalar_lea.sflag [#allocation4], %s398
        %s400 = sand.u32 %s119, 1
        %s401 = smul.addr %s400, 24
        %s402 = scalar_lea.vmem [#allocation7], %s401
        // Predicated region
        $region41: #{tpu_custom_call.1} parent=27 // pred_check
          %p403 = pneg %p129
        $region42: #{tpu_custom_call.1} parent=27 // pred_check_branch
          %405 = sbr.rel (%p403) target = $region44
        $region43: #{tpu_custom_call.1} parent=27 // pred_region
          %s407 = ssub.s32 384, 384
          %408 = vsyncadd %s399, %s407
          %s409 = smul.addr %s28, 3
          %s410 = smul.addr %s27, 3
          %s411 = sadd.s32 %s409, %s410
          %s412 = smul.addr %s411, 128
          %s413 = scalar_lea.hbm %s2, %s412
          %s414 = sshll.u32 %s402, 4
          %s415 = int_to_ptr.vmem [resolvable:$true] %s414
          %420 = dma.vmem_to_hbm [thread:$0]  %s415, 384, %s413, %s399, 128, 128, 8
        $region44: #{tpu_custom_call.1} parent=27 // pred_fallthru
          _
      $region28: #{tpu_custom_call.1} parent=5 // pred_fallthru
        _
      %p421 = scmp.le.s32.totalorder 2, %s17
      // Predicated region
      $region45: #{tpu_custom_call.1} parent=5 // pred_check
        %p422 = pneg %p421
      $region46: #{tpu_custom_call.1} parent=5 // pred_check_branch
        %424 = sbr.rel (%p422) target = $region48
      $region47: #{tpu_custom_call.1} parent=5 // pred_region
        %s425 = ssub.s32 %s17, 2
        // Predicated region
        $region49: #{tpu_custom_call.1} parent=47 // pred_check
          %p426 = pneg %p135
        $region50: #{tpu_custom_call.1} parent=47 // pred_check_branch
          %428 = sbr.rel (%p426) target = $region52
        $region51: #{tpu_custom_call.1} parent=47 // pred_region
          %s429 = sand.u32 %s120, 1
          %s430 = scalar_lea.sflag [#allocation4], %s429
          %s431 = sand.u32 %s120, 1
          %s432 = smul.addr %s431, 24
          %s433 = scalar_lea.vmem [#allocation7], %s432
          %434 = dma.done %s430, 384
        $region52: #{tpu_custom_call.1} parent=47 // pred_fallthru
          _
      $region48: #{tpu_custom_call.1} parent=5 // pred_fallthru
        _
    $region6: #{tpu_custom_call.1} parent=1 // loop_footer
      %s21 = sadd.s32 1, %s17
    $region7: #{tpu_custom_call.1} parent=1 // loop_footer_branch
      %16 = sbr.rel target = $region3
    $region8: #{tpu_custom_call.1} parent=1 // loop_exit
      _
    %435 = vsyncpa [#allocation3], 1
    %s436 = scalar_lea.sflag [#allocation3], 1
    %437 = vsyncpa %s436, 1
    %438 = vsyncpa [#allocation6], 1
    %s439 = scalar_lea.sflag [#allocation6], 1
    %440 = vsyncpa %s439, 1
    %441 = vsyncpa [#allocation4], 1
    %s442 = scalar_lea.sflag [#allocation4], 1
    %443 = vsyncpa %s442, 1

</llo_original>
